<compile_context>
chip_gen: v7x
topology: tpu7x:2x2x1
jax: 0.10.0
libtpu: 0.0.40
codegen_flags: <defaults>
</compile_context>

<pallas_src>
import jax
import jax.numpy as jnp
from jax import lax
from jax.experimental import pallas as pl
from jax.experimental.pallas import tpu as pltpu

KERNEL_SIZE = 7
PAD = KERNEL_SIZE // 2


def _round_up(v, m):
    return ((v + m - 1) // m) * m


def _sublane_pack(dtype):
    # Sub-32-bit dtypes pack along sublanes: 8 rows f32, 16 bf16, 32 int8.
    itemsize = jnp.dtype(dtype).itemsize
    return 8 * max(1, 4 // itemsize)


def _vmem_budgets():
    """(per_input_buffer_bytes, vmem_limit_bytes), generation aware."""
    vmem_cap = 64 * 1024 * 1024          # conservative default (v7x per-TC VMEM)
    try:
        cap = getattr(pltpu.get_tpu_info(), "vmem_capacity_bytes", None)
        if cap:
            vmem_cap = int(cap)
    except Exception:
        pass
    # ~half of physical VMEM as the scoped limit; a quarter of that per input
    # buffer (input is double buffered) leaves room for output/scratch/headroom.
    vmem_limit = int(min(vmem_cap // 2, 96 * 1024 * 1024))
    per_buffer = vmem_limit // 4
    return per_buffer, vmem_limit


def _choose_channel_tile(C, L, dtype, per_buffer_budget):
    """Channel tile TC so one (TC, L) block — with lane padding to
    round_up(L, 128) and dtype sublane packing — fits in per_buffer_budget."""
    itemsize = jnp.dtype(dtype).itemsize
    row_bytes = _round_up(L, 128) * itemsize          # physical row incl. lane pad
    pack = _sublane_pack(dtype)
    rows = per_buffer_budget // max(1, row_bytes)
    if rows >= _round_up(C, pack):
        return C                                      # whole channel dim in one block
    tc = max(pack, (rows // pack) * pack)             # keep sublane dim packed
    # TODO(synk): L-tiled path with a 3-lane conv halo for multi-million L where
    # even a single (pack, L) block exceeds the per-buffer budget.
    return min(tc, C)


def _make_kernel(C, TC, L, Lp, needs_c_mask):
    inv_c = 1.0 / float(C)                            # mean = running_sum * (1/C)

    def kernel(w_ref, b_ref, x_ref, o_ref, max_ref, sum_ref):
        # w_ref  : (2, K) f32 SMEM    Conv1d weight (out channel squeezed)
        # b_ref  : (1,)  f32 SMEM     Conv1d bias
        # x_ref  : (1, TC, L) VMEM    one channel tile of one batch element
        # o_ref  : (1, 1, Lp) VMEM    sigmoid(conv) output (lane padded)
        # max_ref: (1, Lp) f32 VMEM   running channel max  (zero [L, Lp) tail)
        # sum_ref: (1, Lp) f32 VMEM   running channel sum  (zero [L, Lp) tail)
        c = pl.program_id(1)
        nc = pl.num_programs(1)

        xt = x_ref[0]                                            # (TC, L)

        # Hot path: unmasked reductions on every tile.  Max stays in the input
        # dtype (exact for bf16); only the (1, L) result is cast.  Sum in f32.
        t_max = jnp.max(xt, axis=0, keepdims=True).astype(jnp.float32)   # (1, L)
        t_sum = jnp.sum(xt.astype(jnp.float32), axis=0, keepdims=True)   # (1, L)

        @pl.when(c == 0)
        def _init():
            # Zero only the [L, Lp) lane tail (once per batch element); the
            # zero tail is what makes the circular rolls reproduce Conv1d's
            # zero padding exactly.
            tail = jnp.zeros((1, Lp - L), jnp.float32)
            max_ref[:, L:Lp] = tail
            sum_ref[:, L:Lp] = tail
            max_ref[:, :L] = t_max
            sum_ref[:, :L] = t_sum

        last_unmasked = nc - 2 if needs_c_mask else nc - 1

        @pl.when(jnp.logical_and(c > 0, c <= last_unmasked))
        def _accumulate():
            max_ref[:, :L] = jnp.maximum(max_ref[:, :L], t_max)
            sum_ref[:, :L] = sum_ref[:, :L] + t_sum

        if needs_c_mask:
            # Only the final (ragged) channel tile pays for the validity mask;
            # when C % TC != 0 there are always >= 2 tiles, so c == 0 above is
            # never the masked tile.
            @pl.when(c == nc - 1)
            def _accumulate_masked():
                ch = lax.broadcasted_iota(jnp.int32, xt.shape, 0) + c * TC
                valid = ch < C
                xm = jnp.where(valid, xt, jnp.array(-jnp.inf, dtype=xt.dtype))
                xs = jnp.where(valid, xt.astype(jnp.float32), 0.0)
                m_last = jnp.max(xm, axis=0, keepdims=True).astype(jnp.float32)
                s_last = jnp.sum(xs, axis=0, keepdims=True)
                max_ref[:, :L] = jnp.maximum(max_ref[:, :L], m_last)
                sum_ref[:, :L] = sum_ref[:, :L] + s_last

        @pl.when(c == nc - 1)
        def _finalize():
            mx = max_ref[...]                         # (1, Lp), zero tail
            av = sum_ref[...] * inv_c                 # (1, Lp), zero tail
            cat = jnp.concatenate([mx, av], axis=0)   # (2, Lp): [max; avg]

            # Hoist scalar weight reads out of the tap loop.
            w0 = [w_ref[0, k] for k in range(KERNEL_SIZE)]
            w1 = [w_ref[1, k] for k in range(KERNEL_SIZE)]

            # Conv1d(2 -> 1, k=7, pad=3) as 7 circular lane rolls (XLU).
            # Lp >= L + PAD and the [L, Lp) tail is zero, so wrapped lanes
            # contribute exactly the zero padding -> no boundary masks needed.
            acc = jnp.full((1, Lp), b_ref[0], dtype=jnp.float32)
            for k in range(KERNEL_SIZE):
                shift = (PAD - k) % Lp
                r = cat if shift == 0 else pltpu.roll(cat, shift=shift, axis=1)
                acc = acc + w0[k] * r[0:1, :] + w1[k] * r[1:2, :]

            o_ref[0] = jax.nn.sigmoid(acc).astype(o_ref.dtype)

    return kernel


def spatial_attention(x, weight, bias):
    """x: (B, C, L); weight: (1, 2, K); bias: (1,) -> (B, 1, L) in x.dtype."""
    B, C, L = x.shape
    Lp = _round_up(L + PAD, 128)                      # lane-dense, roll-safe
    per_buffer, vmem_limit = _vmem_budgets()
    TC = _choose_channel_tile(C, L, x.dtype, per_buffer)
    n_ct = pl.cdiv(C, TC)
    needs_c_mask = (C % TC) != 0

    # TODO(synk): small-L lane-folding fallback (fold channel groups into the
    # lane dim when L << 128, collapse with log2(G) lane rolls before the conv).
    # TODO(synk): for B == 1 on v7x, split the channel axis across both
    # TensorCores (partial max/sum + tiny combine epilogue); with grid=(B, n_ct)
    # only B is "parallel", so B >= 2 is needed to use both cores.

    w2d = weight.reshape(2, KERNEL_SIZE).astype(jnp.float32)
    b1d = bias.reshape(1).astype(jnp.float32)

    kernel = _make_kernel(C, TC, L, Lp, needs_c_mask)

    out = pl.pallas_call(
        kernel,
        out_shape=jax.ShapeDtypeStruct((B, 1, Lp), x.dtype),
        grid=(B, n_ct),
        in_specs=[
            pl.BlockSpec(memory_space=pltpu.MemorySpace.SMEM),    # weight
            pl.BlockSpec(memory_space=pltpu.MemorySpace.SMEM),    # bias
            pl.BlockSpec((1, TC, L), lambda b, c: (b, c, 0)),     # x
        ],
        out_specs=pl.BlockSpec((1, 1, Lp), lambda b, c: (b, 0, 0)),
        scratch_shapes=[
            pltpu.VMEM((1, Lp), jnp.float32),                     # running max
            pltpu.VMEM((1, Lp), jnp.float32),                     # running sum
        ],
        compiler_params=pltpu.CompilerParams(
            dimension_semantics=("parallel", "arbitrary"),
            vmem_limit_bytes=vmem_limit,
        ),
    )(w2d, b1d, x)

    return out[:, :, :L]


def spatial_attention_ref(x, weight, bias):
    """Pure-JAX reference mirroring the PyTorch module."""
    mx = jnp.max(x, axis=1, keepdims=True)
    av = jnp.mean(x, axis=1, keepdims=True)
    cat = jnp.concatenate([mx, av], axis=1)                       # (B, 2, L)
    y = lax.conv_general_dilated(
        cat.astype(jnp.float32), weight.astype(jnp.float32),
        window_strides=(1,), padding=[(PAD, PAD)],
        dimension_numbers=("NCH", "OIH", "NCH"))
    return jax.nn.sigmoid(y + bias.reshape(1, 1, 1)).astype(x.dtype)


if __name__ == "__main__":
    key = jax.random.PRNGKey(0)
    kx, kw, kb = jax.random.split(key, 3)

    B, C, L = 2, 4, 16
    x = jax.random.normal(kx, (B, C, L), dtype=jnp.float32)

    # Deterministic Conv1d(2, 1, k=7) parameters (synthetic init).
    fan_in = 2 * KERNEL_SIZE
    bound = 1.0 / (fan_in ** 0.5)
    weight = jax.random.uniform(kw, (1, 2, KERNEL_SIZE), jnp.float32,
                                minval=-bound, maxval=bound)
    bias = jax.random.uniform(kb, (1,), jnp.float32, minval=-bound, maxval=bound)

    out = jax.block_until_ready(spatial_attention(x, weight, bias))
    ref = jax.block_until_ready(spatial_attention_ref(x, weight, bias))

    assert out.shape == (B, 1, L), out.shape
    assert jnp.allclose(out, ref, atol=1e-5, rtol=1e-5), float(jnp.max(jnp.abs(out - ref)))
    print("KERNEL_OK")
</pallas_src>

<mosaic_0001>
module attributes {stable_mosaic.version = 11 : i64} {
  func.func @kernel(%arg0: i32, %arg1: i32, %arg2: memref<2x7xf32, #tpu.memory_space<smem>>, %arg3: memref<1xf32, #tpu.memory_space<smem>>, %arg4: memref<1x4x16xf32, #tpu.memory_space<vmem>>, %arg5: memref<1x1x128xf32, #tpu.memory_space<vmem>>, %arg6: memref<1x128xf32, #tpu.memory_space<vmem>>, %arg7: memref<1x128xf32, #tpu.memory_space<vmem>>) attributes {dimension_semantics = [#tpu.dimension_semantics<parallel>, #tpu.dimension_semantics<arbitrary>], iteration_bounds = array<i64: 2, 1>, scalar_prefetch = 0 : i64, scratch_operands = 2 : i64, tpu.core_type = #tpu.core_type<tc>, window_params = [{transform_indices = @transform_0, window_bounds = array<i64: 2, 7>}, {transform_indices = @transform_1, window_bounds = array<i64: 1>}, {transform_indices = @transform_2, window_bounds = array<i64: 1, 4, 16>}, {transform_indices = @transform_3, window_bounds = array<i64: 1, 1, 128>}]} {
    %c0 = arith.constant 0 : index
    %c0_0 = arith.constant 0 : index
    %c0_1 = arith.constant 0 : index
    %0 = vector.load %arg4[%c0, %c0_0, %c0_1] : memref<1x4x16xf32, #tpu.memory_space<vmem>>, vector<1x4x16xf32>
    %1 = vector.shape_cast %0 : vector<1x4x16xf32> to vector<4x16xf32>
    %cst = arith.constant dense<0xFF800000> : vector<16xf32>
    %2 = vector.multi_reduction <maximumf>, %1, %cst [0] : vector<4x16xf32> to vector<16xf32>
    %3 = vector.shape_cast %2 : vector<16xf32> to vector<1x16xf32>
    %cst_2 = arith.constant dense<0.000000e+00> : vector<16xf32>
    %4 = vector.multi_reduction <add>, %1, %cst_2 [0] : vector<4x16xf32> to vector<16xf32>
    %5 = vector.shape_cast %4 : vector<16xf32> to vector<1x16xf32>
    %c0_i32 = arith.constant 0 : i32
    %6 = arith.cmpi eq, %arg1, %c0_i32 : i32
    %7 = arith.extui %6 : i1 to i32
    %c0_i32_3 = arith.constant 0 : i32
    %8 = arith.cmpi ne, %7, %c0_i32_3 : i32
    scf.if %8 {
      %cst_9 = arith.constant 0.000000e+00 : f32
      %17 = vector.broadcast %cst_9 : f32 to vector<1x112xf32>
      %c0_10 = arith.constant 0 : index
      %c16 = arith.constant 16 : index
      %18 = vector.load %arg6[%c0_10, %c16] : memref<1x128xf32, #tpu.memory_space<vmem>>, vector<1x112xf32>
      tpu.vector_store %arg6[%c0_10, %c16], %17 {strides = array<i32>} : memref<1x128xf32, #tpu.memory_space<vmem>>, vector<1x112xf32>,
      %c0_11 = arith.constant 0 : index
      %c16_12 = arith.constant 16 : index
      %19 = vector.load %arg7[%c0_11, %c16_12] : memref<1x128xf32, #tpu.memory_space<vmem>>, vector<1x112xf32>
      tpu.vector_store %arg7[%c0_11, %c16_12], %17 {strides = array<i32>} : memref<1x128xf32, #tpu.memory_space<vmem>>, vector<1x112xf32>,
      %c0_13 = arith.constant 0 : index
      %c0_14 = arith.constant 0 : index
      %20 = vector.load %arg6[%c0_13, %c0_14] : memref<1x128xf32, #tpu.memory_space<vmem>>, vector<1x16xf32>
      tpu.vector_store %arg6[%c0_13, %c0_14], %3 {strides = array<i32>} : memref<1x128xf32, #tpu.memory_space<vmem>>, vector<1x16xf32>,
      %c0_15 = arith.constant 0 : index
      %c0_16 = arith.constant 0 : index
      %21 = vector.load %arg7[%c0_15, %c0_16] : memref<1x128xf32, #tpu.memory_space<vmem>>, vector<1x16xf32>
      tpu.vector_store %arg7[%c0_15, %c0_16], %5 {strides = array<i32>} : memref<1x128xf32, #tpu.memory_space<vmem>>, vector<1x16xf32>,
    } else {
    }
    %c0_i32_4 = arith.constant 0 : i32
    %9 = arith.cmpi sgt, %arg1, %c0_i32_4 : i32
    %c0_i32_5 = arith.constant 0 : i32
    %10 = arith.cmpi sle, %arg1, %c0_i32_5 : i32
    %11 = arith.andi %9, %10 : i1
    %12 = arith.extui %11 : i1 to i32
    %c0_i32_6 = arith.constant 0 : i32
    %13 = arith.cmpi ne, %12, %c0_i32_6 : i32
    scf.if %13 {
      %c0_9 = arith.constant 0 : index
      %c0_10 = arith.constant 0 : index
      %17 = vector.load %arg6[%c0_9, %c0_10] : memref<1x128xf32, #tpu.memory_space<vmem>>, vector<1x16xf32>
      %18 = arith.maximumf %17, %3 : vector<1x16xf32>
      %c0_11 = arith.constant 0 : index
      %c0_12 = arith.constant 0 : index
      %19 = vector.load %arg6[%c0_11, %c0_12] : memref<1x128xf32, #tpu.memory_space<vmem>>, vector<1x16xf32>
      tpu.vector_store %arg6[%c0_11, %c0_12], %18 {strides = array<i32>} : memref<1x128xf32, #tpu.memory_space<vmem>>, vector<1x16xf32>,
      %c0_13 = arith.constant 0 : index
      %c0_14 = arith.constant 0 : index
      %20 = vector.load %arg7[%c0_13, %c0_14] : memref<1x128xf32, #tpu.memory_space<vmem>>, vector<1x16xf32>
      %21 = arith.addf %20, %5 : vector<1x16xf32>
      %c0_15 = arith.constant 0 : index
      %c0_16 = arith.constant 0 : index
      %22 = vector.load %arg7[%c0_15, %c0_16] : memref<1x128xf32, #tpu.memory_space<vmem>>, vector<1x16xf32>
      tpu.vector_store %arg7[%c0_15, %c0_16], %21 {strides = array<i32>} : memref<1x128xf32, #tpu.memory_space<vmem>>, vector<1x16xf32>,
    } else {
    }
    %c0_i32_7 = arith.constant 0 : i32
    %14 = arith.cmpi eq, %arg1, %c0_i32_7 : i32
    %15 = arith.extui %14 : i1 to i32
    %c0_i32_8 = arith.constant 0 : i32
    %16 = arith.cmpi ne, %15, %c0_i32_8 : i32
    scf.if %16 {
      %c0_9 = arith.constant 0 : index
      %c0_10 = arith.constant 0 : index
      %17 = vector.load %arg6[%c0_9, %c0_10] : memref<1x128xf32, #tpu.memory_space<vmem>>, vector<1x128xf32>
      %c0_11 = arith.constant 0 : index
      %c0_12 = arith.constant 0 : index
      %18 = vector.load %arg7[%c0_11, %c0_12] : memref<1x128xf32, #tpu.memory_space<vmem>>, vector<1x128xf32>
      %cst_13 = arith.constant 2.500000e-01 : f32
      %19 = vector.broadcast %cst_13 : f32 to vector<1x128xf32>
      %20 = arith.mulf %18, %19 : vector<1x128xf32>
      %21 = tpu.concatenate %17, %20 in 0 : vector<1x128xf32>, vector<1x128xf32> -> vector<2x128xf32>
      %c0_14 = arith.constant 0 : index
      %c0_15 = arith.constant 0 : index
      %22 = memref.load %arg2[%c0_14, %c0_15] : memref<2x7xf32, #tpu.memory_space<smem>>
      %c0_16 = arith.constant 0 : index
      %c1 = arith.constant 1 : index
      %23 = memref.load %arg2[%c0_16, %c1] : memref<2x7xf32, #tpu.memory_space<smem>>
      %c0_17 = arith.constant 0 : index
      %c2 = arith.constant 2 : index
      %24 = memref.load %arg2[%c0_17, %c2] : memref<2x7xf32, #tpu.memory_space<smem>>
      %c0_18 = arith.constant 0 : index
      %c3 = arith.constant 3 : index
      %25 = memref.load %arg2[%c0_18, %c3] : memref<2x7xf32, #tpu.memory_space<smem>>
      %c0_19 = arith.constant 0 : index
      %c4 = arith.constant 4 : index
      %26 = memref.load %arg2[%c0_19, %c4] : memref<2x7xf32, #tpu.memory_space<smem>>
      %c0_20 = arith.constant 0 : index
      %c5 = arith.constant 5 : index
      %27 = memref.load %arg2[%c0_20, %c5] : memref<2x7xf32, #tpu.memory_space<smem>>
      %c0_21 = arith.constant 0 : index
      %c6 = arith.constant 6 : index
      %28 = memref.load %arg2[%c0_21, %c6] : memref<2x7xf32, #tpu.memory_space<smem>>
      %c1_22 = arith.constant 1 : index
      %c0_23 = arith.constant 0 : index
      %29 = memref.load %arg2[%c1_22, %c0_23] : memref<2x7xf32, #tpu.memory_space<smem>>
      %c1_24 = arith.constant 1 : index
      %c1_25 = arith.constant 1 : index
      %30 = memref.load %arg2[%c1_24, %c1_25] : memref<2x7xf32, #tpu.memory_space<smem>>
      %c1_26 = arith.constant 1 : index
      %c2_27 = arith.constant 2 : index
      %31 = memref.load %arg2[%c1_26, %c2_27] : memref<2x7xf32, #tpu.memory_space<smem>>
      %c1_28 = arith.constant 1 : index
      %c3_29 = arith.constant 3 : index
      %32 = memref.load %arg2[%c1_28, %c3_29] : memref<2x7xf32, #tpu.memory_space<smem>>
      %c1_30 = arith.constant 1 : index
      %c4_31 = arith.constant 4 : index
      %33 = memref.load %arg2[%c1_30, %c4_31] : memref<2x7xf32, #tpu.memory_space<smem>>
      %c1_32 = arith.constant 1 : index
      %c5_33 = arith.constant 5 : index
      %34 = memref.load %arg2[%c1_32, %c5_33] : memref<2x7xf32, #tpu.memory_space<smem>>
      %c1_34 = arith.constant 1 : index
      %c6_35 = arith.constant 6 : index
      %35 = memref.load %arg2[%c1_34, %c6_35] : memref<2x7xf32, #tpu.memory_space<smem>>
      %c0_36 = arith.constant 0 : index
      %36 = memref.load %arg3[%c0_36] : memref<1xf32, #tpu.memory_space<smem>>
      %37 = vector.broadcast %36 : f32 to vector<1x128xf32>
      %c3_i32 = arith.constant 3 : i32
      %38 = tpu.dynamic_rotate %21 by %c3_i32 dim 1 : vector<2x128xf32>, i32 -> vector<2x128xf32>
      %39 = vector.extract_strided_slice %38 {offsets = [0, 0], sizes = [1, 128], strides = [1, 1]} : vector<2x128xf32> to vector<1x128xf32>
      %40 = vector.broadcast %22 : f32 to vector<1x128xf32>
      %41 = arith.mulf %40, %39 : vector<1x128xf32>
      %42 = arith.addf %37, %41 : vector<1x128xf32>
      %43 = vector.extract_strided_slice %38 {offsets = [1, 0], sizes = [1, 128], strides = [1, 1]} : vector<2x128xf32> to vector<1x128xf32>
      %44 = vector.broadcast %29 : f32 to vector<1x128xf32>
      %45 = arith.mulf %44, %43 : vector<1x128xf32>
      %46 = arith.addf %42, %45 : vector<1x128xf32>
      %c2_i32 = arith.constant 2 : i32
      %47 = tpu.dynamic_rotate %21 by %c2_i32 dim 1 : vector<2x128xf32>, i32 -> vector<2x128xf32>
      %48 = vector.extract_strided_slice %47 {offsets = [0, 0], sizes = [1, 128], strides = [1, 1]} : vector<2x128xf32> to vector<1x128xf32>
      %49 = vector.broadcast %23 : f32 to vector<1x128xf32>
      %50 = arith.mulf %49, %48 : vector<1x128xf32>
      %51 = arith.addf %46, %50 : vector<1x128xf32>
      %52 = vector.extract_strided_slice %47 {offsets = [1, 0], sizes = [1, 128], strides = [1, 1]} : vector<2x128xf32> to vector<1x128xf32>
      %53 = vector.broadcast %30 : f32 to vector<1x128xf32>
      %54 = arith.mulf %53, %52 : vector<1x128xf32>
      %55 = arith.addf %51, %54 : vector<1x128xf32>
      %c1_i32 = arith.constant 1 : i32
      %56 = tpu.dynamic_rotate %21 by %c1_i32 dim 1 : vector<2x128xf32>, i32 -> vector<2x128xf32>
      %57 = vector.extract_strided_slice %56 {offsets = [0, 0], sizes = [1, 128], strides = [1, 1]} : vector<2x128xf32> to vector<1x128xf32>
      %58 = vector.broadcast %24 : f32 to vector<1x128xf32>
      %59 = arith.mulf %58, %57 : vector<1x128xf32>
      %60 = arith.addf %55, %59 : vector<1x128xf32>
      %61 = vector.extract_strided_slice %56 {offsets = [1, 0], sizes = [1, 128], strides = [1, 1]} : vector<2x128xf32> to vector<1x128xf32>
      %62 = vector.broadcast %31 : f32 to vector<1x128xf32>
      %63 = arith.mulf %62, %61 : vector<1x128xf32>
      %64 = arith.addf %60, %63 : vector<1x128xf32>
      %65 = vector.extract_strided_slice %21 {offsets = [0, 0], sizes = [1, 128], strides = [1, 1]} : vector<2x128xf32> to vector<1x128xf32>
      %66 = vector.broadcast %25 : f32 to vector<1x128xf32>
      %67 = arith.mulf %66, %65 : vector<1x128xf32>
      %68 = arith.addf %64, %67 : vector<1x128xf32>
      %69 = vector.extract_strided_slice %21 {offsets = [1, 0], sizes = [1, 128], strides = [1, 1]} : vector<2x128xf32> to vector<1x128xf32>
      %70 = vector.broadcast %32 : f32 to vector<1x128xf32>
      %71 = arith.mulf %70, %69 : vector<1x128xf32>
      %72 = arith.addf %68, %71 : vector<1x128xf32>
      %c127_i32 = arith.constant 127 : i32
      %73 = tpu.dynamic_rotate %21 by %c127_i32 dim 1 : vector<2x128xf32>, i32 -> vector<2x128xf32>
      %74 = vector.extract_strided_slice %73 {offsets = [0, 0], sizes = [1, 128], strides = [1, 1]} : vector<2x128xf32> to vector<1x128xf32>
      %75 = vector.broadcast %26 : f32 to vector<1x128xf32>
      %76 = arith.mulf %75, %74 : vector<1x128xf32>
      %77 = arith.addf %72, %76 : vector<1x128xf32>
      %78 = vector.extract_strided_slice %73 {offsets = [1, 0], sizes = [1, 128], strides = [1, 1]} : vector<2x128xf32> to vector<1x128xf32>
      %79 = vector.broadcast %33 : f32 to vector<1x128xf32>
      %80 = arith.mulf %79, %78 : vector<1x128xf32>
      %81 = arith.addf %77, %80 : vector<1x128xf32>
      %c126_i32 = arith.constant 126 : i32
      %82 = tpu.dynamic_rotate %21 by %c126_i32 dim 1 : vector<2x128xf32>, i32 -> vector<2x128xf32>
      %83 = vector.extract_strided_slice %82 {offsets = [0, 0], sizes = [1, 128], strides = [1, 1]} : vector<2x128xf32> to vector<1x128xf32>
      %84 = vector.broadcast %27 : f32 to vector<1x128xf32>
      %85 = arith.mulf %84, %83 : vector<1x128xf32>
      %86 = arith.addf %81, %85 : vector<1x128xf32>
      %87 = vector.extract_strided_slice %82 {offsets = [1, 0], sizes = [1, 128], strides = [1, 1]} : vector<2x128xf32> to vector<1x128xf32>
      %88 = vector.broadcast %34 : f32 to vector<1x128xf32>
      %89 = arith.mulf %88, %87 : vector<1x128xf32>
      %90 = arith.addf %86, %89 : vector<1x128xf32>
      %c125_i32 = arith.constant 125 : i32
      %91 = tpu.dynamic_rotate %21 by %c125_i32 dim 1 : vector<2x128xf32>, i32 -> vector<2x128xf32>
      %92 = vector.extract_strided_slice %91 {offsets = [0, 0], sizes = [1, 128], strides = [1, 1]} : vector<2x128xf32> to vector<1x128xf32>
      %93 = vector.broadcast %28 : f32 to vector<1x128xf32>
      %94 = arith.mulf %93, %92 : vector<1x128xf32>
      %95 = arith.addf %90, %94 : vector<1x128xf32>
      %96 = vector.extract_strided_slice %91 {offsets = [1, 0], sizes = [1, 128], strides = [1, 1]} : vector<2x128xf32> to vector<1x128xf32>
      %97 = vector.broadcast %35 : f32 to vector<1x128xf32>
      %98 = arith.mulf %97, %96 : vector<1x128xf32>
      %99 = arith.addf %95, %98 : vector<1x128xf32>
      %100 = arith.negf %99 : vector<1x128xf32>
      %101 = math.exp %100 : vector<1x128xf32>
      %cst_37 = arith.constant 1.000000e+00 : f32
      %102 = vector.broadcast %cst_37 : f32 to vector<1x128xf32>
      %103 = arith.addf %102, %101 : vector<1x128xf32>
      %104 = arith.divf %102, %103 : vector<1x128xf32>
      %c0_38 = arith.constant 0 : index
      %c0_39 = arith.constant 0 : index
      %c0_40 = arith.constant 0 : index
      %105 = vector.load %arg5[%c0_38, %c0_39, %c0_40] : memref<1x1x128xf32, #tpu.memory_space<vmem>>, vector<1x1x128xf32>
      %106 = vector.shape_cast %105 : vector<1x1x128xf32> to vector<1x128xf32>
      %107 = vector.shape_cast %104 : vector<1x128xf32> to vector<1x1x128xf32>
      tpu.vector_store %arg5[%c0_38, %c0_39, %c0_40], %107 {strides = array<i32>} : memref<1x1x128xf32, #tpu.memory_space<vmem>>, vector<1x1x128xf32>,
    } else {
    }
    return
  }
  func.func @transform_0(%arg0: i32, %arg1: i32) -> (i32, i32) {
    %c0_i32 = arith.constant 0 : i32
    %c0_i32_0 = arith.constant 0 : i32
    %c0_i32_1 = arith.constant 0 : i32
    return %c0_i32, %c0_i32_0 : i32, i32
  }
  func.func @transform_1(%arg0: i32, %arg1: i32) -> i32 {
    %c0_i32 = arith.constant 0 : i32
    %c0_i32_0 = arith.constant 0 : i32
    return %c0_i32 : i32
  }
  func.func @transform_2(%arg0: i32, %arg1: i32) -> (i32, i32, i32) {
    %c0_i32 = arith.constant 0 : i32
    %c0_i32_0 = arith.constant 0 : i32
    return %arg0, %arg1, %c0_i32 : i32, i32, i32
  }
  func.func @transform_3(%arg0: i32, %arg1: i32) -> (i32, i32, i32) {
    %c0_i32 = arith.constant 0 : i32
    %c0_i32_0 = arith.constant 0 : i32
    %c0_i32_1 = arith.constant 0 : i32
    return %arg0, %c0_i32, %c0_i32_0 : i32, i32, i32
  }
}

</mosaic_0001>

<llo_original>
// kernel: tpu_custom_call.1
$region0: #{tpu_custom_call.1}
  #allocation0 [shape = 'u32[]', space=smem, size = 0x4, offset = 0x4, fixed_abs, tag = 'smem constant byte address 0x4 - core index']
  #allocation1 [shape = 'u32[144,128]{1,0:T(1,128)}', space=vmem, size = 0x12000, scoped, tag = 'internal scratch']
  #allocation2 [shape = 'f32[1,128]{1,0:T(1,128)}', space=vmem, size = 0x200, scoped, tag = 'scratch operand']
  #allocation3 [shape = 'f32[1,128]{1,0:T(1,128)}', space=vmem, size = 0x200, scoped, tag = 'scratch operand']
  #allocation4 [shape = 'f32[1]{0:T(128)S(6)}', space=smem, size = 0x200, scoped, tag = 'scoped memory for tpu_custom_call.1']
  %s0 = inlined_call_operand.vmem [shape: f32[2,7], index: 0, kind: input, shape index: {}]
  %s1 = inlined_call_operand.<no memory space> [shape: f32[1], index: 1, kind: input, shape index: {}]
  %s2 = inlined_call_operand.hbm [shape: f32[2,4,16], index: 2, kind: input, shape index: {}]
  %s3 = inlined_call_operand.hbm [shape: f32[2,1,128], index: 3, kind: output, shape index: {}]
  %s4 = sld [smem:[#allocation0]]
  $region65: #{tpu_custom_call.1} parent=0
    _
  %s6 = ssub.s32 1, %s4
  %s7 = scalar_select 0, %s6, %s4
  %8 = sst [smem:[#allocation4]] %s1
  $region1: #{tpu_custom_call.1} parent=0
    #allocation5 [shape = 'u8[1024]{0}', space=smem, size = 0x400, scoped, tag = 'input window, operand 0, single buffered']
    #allocation6 [shape = 's32[2]{0}', space=sflag, size = 0x8, scoped, tag = 'scoped memory for tpu_custom_call.1']
    #allocation7 [shape = 's32[2]{0}', space=sflag, size = 0x8, scoped, tag = 'scoped memory for tpu_custom_call.1']
    #allocation8 [shape = 's32[2]{0}', space=sflag, size = 0x8, scoped, tag = 'scoped memory for tpu_custom_call.1']
    #allocation9 [shape = 'u8[4096]{0}', space=vmem, size = 0x1000, scoped, tag = 'input window, operand 2']
    #allocation10 [shape = 'u8[1024]{0}', space=vmem, size = 0x400, scoped, tag = 'output window, operand 0']
    %9 = vsyncpa [#allocation8], 0
    %10 = vsyncpa [#allocation6], 0
    %s11 = scalar_lea.sflag [#allocation6], 1
    %12 = vsyncpa %s11, 0
    %13 = vsyncpa [#allocation7], 0
    %s14 = scalar_lea.sflag [#allocation7], 1
    %15 = vsyncpa %s14, 0
    loop: start=0, step=1, limit=4
    $region2: #{tpu_custom_call.1} parent=1 // loop_pre_header
      _
    $region3: #{tpu_custom_call.1} parent=1 // loop_header
      %s17 = sphi 0, %s21
      %p18 = scmp.ge.s32.totalorder %s17, 4
      %s24 = sphi 0, %s36
      %s25 = sphi 0, %s32
      %s26 = sphi 0, %s24
      %s27 = sphi 0, %s25
      %s28 = sphi 0, %s26
      %s29 = sphi 0, %s27
      %s37 = sphi 0, %s37
      %s39 = sphi 0, %s37
      %s40 = sphi 0, %s39
      %s54 = sphi 0, %s40
      %s58 = sphi 0, %s58
      %s60 = sphi 0, %s58
      %s61 = sphi 0, %s60
      %s75 = sphi 0, %s61
      %s83 = sphi 0, %s85
      %s86 = sphi 0, %s83
      %s87 = sphi 0, %s86
      %s103 = sphi 0, %s87
      %s109 = sphi 0, %s111
      %s112 = sphi 0, %s109
      %s113 = sphi 0, %s112
      %s129 = sphi 0, %s113
    $region4: #{tpu_custom_call.1} parent=1 // loop_header_branch
      %20 = sbr.rel (%p18) target = $region8
    $region5: #{tpu_custom_call.1} parent=1 // loop_body
      %s22 = ssub.s32 %s17, 1
      %s23 = ssub.s32 %s17, 2
      %s30 = sadd.s32 1, %s25
      %p31 = scmp.ge.s32.totalorder %s30, 1
      %s32 = scalar_select %p31, 0, %s30
      %s33 = sadd.s32 1, %s24
      %s34 = scalar_select %p31, %s33, %s24
      %p35 = scmp.ge.s32.totalorder %s34, 2
      %s36 = scalar_select %p35, 0, %s34
      %s38 = sadd.s32 %s37, 1
      %p41 = scmp.eq.s32.totalorder %s17, 1
      %p42 = scmp.ne.s32.totalorder %s37, %s39
      %p43 = scmp.eq.s32.totalorder %s17, 0
      %p44 = por %p42, %p43
      %p45 = scmp.ne.s32.totalorder %s37, %s39
      %p46 = scmp.eq.s32.totalorder %s22, 1
      %p47 = por %p45, %p46
      %p48 = scmp.ne.s32.totalorder %s39, %s40
      %p49 = scmp.eq.s32.totalorder %s22, 0
      %p50 = por %p48, %p49
      %p51 = scmp.ne.s32.totalorder %s39, %s40
      %p52 = scmp.eq.s32.totalorder %s23, 1
      %p53 = por %p51, %p52
      %p55 = scmp.ne.s32.totalorder %s40, %s54
      %p56 = scmp.eq.s32.totalorder %s23, 0
      %p57 = por %p55, %p56
      %s59 = sadd.s32 %s58, 1
      %p62 = scmp.eq.s32.totalorder %s17, 1
      %p63 = scmp.ne.s32.totalorder %s58, %s60
      %p64 = scmp.eq.s32.totalorder %s17, 0
      %p65 = por %p63, %p64
      %p66 = scmp.ne.s32.totalorder %s58, %s60
      %p67 = scmp.eq.s32.totalorder %s22, 1
      %p68 = por %p66, %p67
      %p69 = scmp.ne.s32.totalorder %s60, %s61
      %p70 = scmp.eq.s32.totalorder %s22, 0
      %p71 = por %p69, %p70
      %p72 = scmp.ne.s32.totalorder %s60, %s61
      %p73 = scmp.eq.s32.totalorder %s23, 1
      %p74 = por %p72, %p73
      %p76 = scmp.ne.s32.totalorder %s61, %s75
      %p77 = scmp.eq.s32.totalorder %s23, 0
      %p78 = por %p76, %p77
      %s79 = ssub.s32 %s24, %s36
      %s80 = ssub.s32 %s25, %s32
      %s81 = sor.u32 %s79, %s80
      %p82 = scmp.eq.s32.totalorder %s81, 0
      %s84 = sadd.s32 %s83, 1
      %s85 = scalar_select %p82, %s83, %s84
      %p88 = pneg %p82
      %p89 = scmp.eq.s32.totalorder %s17, 1
      %p90 = por %p88, %p89
      %p91 = scmp.ne.s32.totalorder %s83, %s86
      %p92 = scmp.eq.s32.totalorder %s17, 0
      %p93 = por %p91, %p92
      %p94 = scmp.ne.s32.totalorder %s83, %s86
      %p95 = scmp.eq.s32.totalorder %s22, 1
      %p96 = por %p94, %p95
      %p97 = scmp.ne.s32.totalorder %s86, %s87
      %p98 = scmp.eq.s32.totalorder %s22, 0
      %p99 = por %p97, %p98
      %p100 = scmp.ne.s32.totalorder %s86, %s87
      %p101 = scmp.eq.s32.totalorder %s23, 1
      %p102 = por %p100, %p101
      %p104 = scmp.ne.s32.totalorder %s87, %s103
      %p105 = scmp.eq.s32.totalorder %s23, 0
      %p106 = por %p104, %p105
      %s107 = ssub.s32 %s24, %s36
      %p108 = scmp.eq.s32.totalorder %s107, 0
      %s110 = sadd.s32 %s109, 1
      %s111 = scalar_select %p108, %s109, %s110
      %p114 = pneg %p108
      %p115 = scmp.eq.s32.totalorder %s17, 1
      %p116 = por %p114, %p115
      %p117 = scmp.ne.s32.totalorder %s109, %s112
      %p118 = scmp.eq.s32.totalorder %s17, 0
      %p119 = por %p117, %p118
      %p120 = scmp.ne.s32.totalorder %s109, %s112
      %p121 = scmp.eq.s32.totalorder %s22, 1
      %p122 = por %p120, %p121
      %p123 = scmp.ne.s32.totalorder %s112, %s113
      %p124 = scmp.eq.s32.totalorder %s22, 0
      %p125 = por %p123, %p124
      %p126 = scmp.ne.s32.totalorder %s112, %s113
      %p127 = scmp.eq.s32.totalorder %s23, 1
      %p128 = por %p126, %p127
      %p130 = scmp.ne.s32.totalorder %s113, %s129
      %p131 = scmp.eq.s32.totalorder %s23, 0
      %p132 = por %p130, %p131
      %p133 = scmp.le.s32.totalorder 1, %s17
      %p134 = scmp.lt.s32.totalorder %s17, 3
      %p135 = pnand %p133, %p134
      %p136 = pneg %p135
      // Predicated region
      $region9: #{tpu_custom_call.1} parent=5 // pred_check
        _
      $region10: #{tpu_custom_call.1} parent=5 // pred_check_branch
        %138 = sbr.rel (%p135) target = $region12
      $region11: #{tpu_custom_call.1} parent=5 // pred_region
        %s139 = ssub.s32 %s17, 1
        // Predicated region
        $region13: #{tpu_custom_call.1} parent=11 // pred_check
          %p140 = pneg %p50
        $region14: #{tpu_custom_call.1} parent=11 // pred_check_branch
          %142 = sbr.rel (%p140) target = $region16
        $region15: #{tpu_custom_call.1} parent=11 // pred_region
          %s144 = ssub.s32 32, 32
          %145 = vsyncadd [#allocation8], %s144
          %s147 = sshll.u32 %s0, 4
          %s148 = int_to_ptr.vmem [resolvable:$true] %s147
          %150 = dma.vmem_to_smem %s148, 32, [#allocation5], [#allocation8]
        $region16: #{tpu_custom_call.1} parent=11 // pred_fallthru
          _
        // Predicated region
        $region17: #{tpu_custom_call.1} parent=11 // pred_check
          %p151 = pneg %p71
        $region18: #{tpu_custom_call.1} parent=11 // pred_check_branch
          %153 = sbr.rel (%p151) target = $region20
        $region19: #{tpu_custom_call.1} parent=11 // pred_region
          _
        $region20: #{tpu_custom_call.1} parent=11 // pred_fallthru
          _
      $region12: #{tpu_custom_call.1} parent=5 // pred_fallthru
        _
      %p154 = scmp.lt.s32.totalorder %s17, 2
      // Predicated region
      $region21: #{tpu_custom_call.1} parent=5 // pred_check
        %p155 = pneg %p154
      $region22: #{tpu_custom_call.1} parent=5 // pred_check_branch
        %157 = sbr.rel (%p155) target = $region24
      $region23: #{tpu_custom_call.1} parent=5 // pred_region
        // Predicated region
        $region25: #{tpu_custom_call.1} parent=23 // pred_check
          %p158 = pneg %p93
        $region26: #{tpu_custom_call.1} parent=23 // pred_check_branch
          %160 = sbr.rel (%p158) target = $region28
        $region27: #{tpu_custom_call.1} parent=23 // pred_region
          %s161 = sand.u32 %s83, 1
          %s162 = scalar_lea.sflag [#allocation6], %s161
          %s163 = sand.u32 %s83, 1
          %s164 = smul.addr %s163, 4
          %s165 = scalar_lea.vmem [#allocation9], %s164
          %s167 = ssub.s32 64, 64
          %168 = vsyncadd %s162, %s167
          %s169 = sadd.s32 %s25, %s24
          %s170 = smul.addr %s169, 64
          %s171 = scalar_lea.hbm %s2, %s170
          %s173 = sshll.u32 %s165, 4
          %s174 = int_to_ptr.vmem [resolvable:$true] %s173
          %176 = dma.hbm_to_vmem [thread:$0]  %s171, 64, %s174, %s162
        $region28: #{tpu_custom_call.1} parent=23 // pred_fallthru
          _
      $region24: #{tpu_custom_call.1} parent=5 // pred_fallthru
        _
      %p177 = scmp.le.s32.totalorder 1, %s17
      %p178 = scmp.lt.s32.totalorder %s17, 3
      %p179 = pnand %p177, %p178
      %p180 = pneg %p179
      // Predicated region
      $region29: #{tpu_custom_call.1} parent=5 // pred_check
        _
      $region30: #{tpu_custom_call.1} parent=5 // pred_check_branch
        %182 = sbr.rel (%p179) target = $region32
      $region31: #{tpu_custom_call.1} parent=5 // pred_region
        %s183 = ssub.s32 %s17, 1
        // Predicated region
        $region33: #{tpu_custom_call.1} parent=31 // pred_check
          %p184 = pneg %p50
        $region34: #{tpu_custom_call.1} parent=31 // pred_check_branch
          %186 = sbr.rel (%p184) target = $region36
        $region35: #{tpu_custom_call.1} parent=31 // pred_region
          %187 = dma.done [#allocation8], 32
        $region36: #{tpu_custom_call.1} parent=31 // pred_fallthru
          _
        %s188 = sand.u32 %s86, 1
        %s189 = scalar_lea.sflag [#allocation6], %s188
        %s190 = sand.u32 %s86, 1
        %s191 = smul.addr %s190, 4
        %s192 = scalar_lea.vmem [#allocation9], %s191
        // Predicated region
        $region37: #{tpu_custom_call.1} parent=31 // pred_check
          %p193 = pneg %p99
        $region38: #{tpu_custom_call.1} parent=31 // pred_check_branch
          %195 = sbr.rel (%p193) target = $region40
        $region39: #{tpu_custom_call.1} parent=31 // pred_region
          %196 = dma.done %s189, 64
        $region40: #{tpu_custom_call.1} parent=31 // pred_fallthru
          _
        %197 = sfence
        %p198 = pneg %p50
        %p199 = pneg %p47
        %p200 = pneg %p71
        %p201 = pneg %p68
        %s202 = sand.u32 %s86, 1
        %s203 = scalar_lea.sflag [#allocation6], %s202
        %s204 = sand.u32 %s86, 1
        %s205 = smul.addr %s204, 4
        %s206 = scalar_lea.vmem [#allocation9], %s205
        %p207 = pneg %p99
        %p208 = pneg %p96
        %p209 = pneg %p125
        %p210 = pneg %p122
        %s211 = sand.u32 %s112, 1
        %s212 = scalar_lea.sflag [#allocation7], %s211
        %s213 = sand.u32 %s112, 1
        %s214 = scalar_lea.vmem [#allocation10], %s213
        %v215 = vld [vmem:[%s192] sm:$0xf]
        %vm216 = vcmask 125952
        %v217 = vsel %vm216, %v215, -inf
        %v218 = vrot.slane %v217, 4
        %v219 = vmax.f32 %v217, %v218
        %v220 = vrot.slane %v219, 2
        %v221 = vmax.f32 %v219, %v220
        %v222 = vrot.slane %v221, 1
        %v223 = vmax.f32 %v221, %v222
        %v224 = vsel %vm216, %v215, 0.0
        %v225 = vrot.slane %v224, 4
        %v226 = vadd.f32 %v224, %v225
        %v227 = vrot.slane %v226, 2
        %v228 = vadd.f32 %v226, %v227
        %v229 = vrot.slane %v228, 1
        %v230 = vadd.f32 %v228, %v229
        %p231 = scmp.eq.s32.totalorder %s27, 0
        // Predicated region
        $region41: #{tpu_custom_call.1} parent=31 // pred_check
          %p232 = pneg %p231
        $region42: #{tpu_custom_call.1} parent=31 // pred_check_branch
          %234 = sbr.rel (%p232) target = $region44
        $region43: #{tpu_custom_call.1} parent=31 // pred_region
          %vm235 = vcmask 1040512
          %236 = vst.msk [vmem:[#allocation2] sm:$0x1] %vm235, 0.0
          %237 = vst.msk [vmem:[#allocation3] sm:$0x1] %vm235, 0.0
          %vm238 = vcmask 122880
          %239 = vst.msk [vmem:[#allocation2] sm:$0x1] %vm238, %v223
          %240 = vst.msk [vmem:[#allocation3] sm:$0x1] %vm238, %v230
        $region44: #{tpu_custom_call.1} parent=31 // pred_fallthru
          _
        %p241 = scmp.gt.s32.totalorder %s27, 0
        %p242 = scmp.le.s32.totalorder %s27, 0
        %p243 = pnand %p241, %p242
        %p244 = pneg %p243
        // Predicated region
        $region45: #{tpu_custom_call.1} parent=31 // pred_check
          _
        $region46: #{tpu_custom_call.1} parent=31 // pred_check_branch
          %246 = sbr.rel (%p243) target = $region48
        $region47: #{tpu_custom_call.1} parent=31 // pred_region
          %v247 = vld [vmem:[#allocation2] sm:$0x1]
          %v248 = vmax.f32 %v247, %v223
          %vm249 = vcmask 122880
          %250 = vst.msk [vmem:[#allocation2] sm:$0x1] %vm249, %v248
          %v251 = vld [vmem:[#allocation3] sm:$0x1]
          %v252 = vadd.f32 %v251, %v230
          %253 = vst.msk [vmem:[#allocation3] sm:$0x1] %vm249, %v252
        $region48: #{tpu_custom_call.1} parent=31 // pred_fallthru
          _
        // Predicated region
        $region49: #{tpu_custom_call.1} parent=31 // pred_check
          %p254 = pneg %p231
        $region50: #{tpu_custom_call.1} parent=31 // pred_check_branch
          %256 = sbr.rel (%p254) target = $region52
        $region51: #{tpu_custom_call.1} parent=31 // pred_region
          %v257 = vld [vmem:[#allocation2] sm:$0x1]
          %v258 = vld [vmem:[#allocation3] sm:$0x1]
          %v259 = vmul.f32 %v258, 0.25
          %v261 = vlaneseq
          %v262 = vshrl.u32 %v261, 7
          %v263 = vsub.s32 0, %v262
          %v264 = vrot.slane %v259, %v263
          %vm266 = vcmask 1040384
          %v267 = vsel %vm266, %v257, %v264
          %s268 = sld [smem:[#allocation5]]
          %s269 = sld [smem:[#allocation5 + $0x1]]
          %s270 = sld [smem:[#allocation5 + $0x2]]
          %s271 = sld [smem:[#allocation5 + $0x3]]
          %s272 = sld [smem:[#allocation5 + $0x4]]
          %s273 = sld [smem:[#allocation5 + $0x5]]
          %s274 = sld [smem:[#allocation5 + $0x6]]
          %s275 = sld [smem:[#allocation5 + $0x80]]
          %s276 = sld [smem:[#allocation5 + $0x81]]
          %s277 = sld [smem:[#allocation5 + $0x82]]
          %s278 = sld [smem:[#allocation5 + $0x83]]
          %s279 = sld [smem:[#allocation5 + $0x84]]
          %s280 = sld [smem:[#allocation5 + $0x85]]
          %s281 = sld [smem:[#allocation5 + $0x86]]
          %s282 = sld [smem:[#allocation4]]
          %v283 = vstv %s282
          %284 = vrot.lane.b32.xlu0 %v267, 3
          %v285 = vpop.permute.xlu0 %284
          %v286 = vstv %s268
          %v287 = vmul.f32 %v286, %v285
          %v288 = vadd.f32 %v283, %v287
          %v289 = vstv %s275
          %v290 = vmul.f32 %v289, %v285
          %v292 = vrot.slane %v290, 1
          %v294 = vadd.f32 %v288, %v292
          %295 = vrot.lane.b32.xlu0 %v267, 2
          %v296 = vpop.permute.xlu0 %295
          %v297 = vstv %s269
          %v298 = vmul.f32 %v297, %v296
          %v299 = vadd.f32 %v294, %v298
          %v300 = vstv %s276
          %v301 = vmul.f32 %v300, %v296
          %v303 = vrot.slane %v301, 1
          %v305 = vadd.f32 %v299, %v303
          %306 = vrot.lane.b32.xlu0 %v267, 1
          %v307 = vpop.permute.xlu0 %306
          %v308 = vstv %s270
          %v309 = vmul.f32 %v308, %v307
          %v310 = vadd.f32 %v305, %v309
          %v311 = vstv %s277
          %v312 = vmul.f32 %v311, %v307
          %v314 = vrot.slane %v312, 1
          %v316 = vadd.f32 %v310, %v314
          %v317 = vstv %s271
          %v318 = vmul.f32 %v317, %v267
          %v319 = vadd.f32 %v316, %v318
          %v320 = vstv %s278
          %v321 = vmul.f32 %v320, %v267
          %v323 = vrot.slane %v321, 1
          %v325 = vadd.f32 %v319, %v323
          %326 = vrot.lane.b32.xlu0 %v267, 127
          %v327 = vpop.permute.xlu0 %326
          %v328 = vstv %s272
          %v329 = vmul.f32 %v328, %v327
          %v330 = vadd.f32 %v325, %v329
          %v331 = vstv %s279
          %v332 = vmul.f32 %v331, %v327
          %v334 = vrot.slane %v332, 1
          %v336 = vadd.f32 %v330, %v334
          %337 = vrot.lane.b32.xlu0 %v267, 126
          %v338 = vpop.permute.xlu0 %337
          %v339 = vstv %s273
          %v340 = vmul.f32 %v339, %v338
          %v341 = vadd.f32 %v336, %v340
          %v342 = vstv %s280
          %v343 = vmul.f32 %v342, %v338
          %v345 = vrot.slane %v343, 1
          %v347 = vadd.f32 %v341, %v345
          %348 = vrot.lane.b32.xlu0 %v267, 125
          %v349 = vpop.permute.xlu0 %348
          %v350 = vstv %s274
          %v351 = vmul.f32 %v350, %v349
          %v352 = vadd.f32 %v347, %v351
          %v353 = vstv %s281
          %v354 = vmul.f32 %v353, %v349
          %v356 = vrot.slane %v354, 1
          %v358 = vadd.f32 %v352, %v356
          %v359 = vxor.u32 %v358, 2147483648
          %v360 = vmul.f32 %v359, 1.442695
          %v361 = vpow.pop %v360
          %v362 = vadd.f32 %v361, 1.0
          %v363 = vrcp.pop %v362
          %v364 = vmul.f32 1.0, %v363
          %365 = vst [vmem:[%s214] sm:$0x1] %v364
        $region52: #{tpu_custom_call.1} parent=31 // pred_fallthru
          _
        %s366 = sand.u32 %s112, 1
        %s367 = scalar_lea.sflag [#allocation7], %s366
        %s368 = sand.u32 %s112, 1
        %s369 = scalar_lea.vmem [#allocation10], %s368
        // Predicated region
        $region53: #{tpu_custom_call.1} parent=31 // pred_check
          %p370 = pneg %p122
        $region54: #{tpu_custom_call.1} parent=31 // pred_check_branch
          %372 = sbr.rel (%p370) target = $region56
        $region55: #{tpu_custom_call.1} parent=31 // pred_region
          %s374 = ssub.s32 16, 16
          %375 = vsyncadd %s367, %s374
          %s376 = smul.addr %s26, 16
          %s377 = scalar_lea.hbm %s3, %s376
          %s379 = sshll.u32 %s369, 4
          %s380 = int_to_ptr.vmem [resolvable:$true] %s379
          %382 = dma.vmem_to_hbm [thread:$0]  %s380, 16, %s377, %s367
        $region56: #{tpu_custom_call.1} parent=31 // pred_fallthru
          _
      $region32: #{tpu_custom_call.1} parent=5 // pred_fallthru
        _
      %p383 = scmp.le.s32.totalorder 2, %s17
      // Predicated region
      $region57: #{tpu_custom_call.1} parent=5 // pred_check
        %p384 = pneg %p383
      $region58: #{tpu_custom_call.1} parent=5 // pred_check_branch
        %386 = sbr.rel (%p384) target = $region60
      $region59: #{tpu_custom_call.1} parent=5 // pred_region
        %s387 = ssub.s32 %s17, 2
        // Predicated region
        $region61: #{tpu_custom_call.1} parent=59 // pred_check
          %p388 = pneg %p128
        $region62: #{tpu_custom_call.1} parent=59 // pred_check_branch
          %390 = sbr.rel (%p388) target = $region64
        $region63: #{tpu_custom_call.1} parent=59 // pred_region
          %s391 = sand.u32 %s113, 1
          %s392 = scalar_lea.sflag [#allocation7], %s391
          %s393 = sand.u32 %s113, 1
          %s394 = scalar_lea.vmem [#allocation10], %s393
          %395 = dma.done %s392, 16
        $region64: #{tpu_custom_call.1} parent=59 // pred_fallthru
          _
      $region60: #{tpu_custom_call.1} parent=5 // pred_fallthru
        _
    $region6: #{tpu_custom_call.1} parent=1 // loop_footer
      %s21 = sadd.s32 1, %s17
    $region7: #{tpu_custom_call.1} parent=1 // loop_footer_branch
      %16 = sbr.rel target = $region3
    $region8: #{tpu_custom_call.1} parent=1 // loop_exit
      _
    %396 = vsyncpa [#allocation6], 1
    %s397 = scalar_lea.sflag [#allocation6], 1
    %398 = vsyncpa %s397, 1
    %399 = vsyncpa [#allocation7], 1
    %s400 = scalar_lea.sflag [#allocation7], 1
    %401 = vsyncpa %s400, 1
    %402 = vsyncpa [#allocation8], 1
    %s403 = scalar_lea.sflag [#allocation8], 1
    %404 = vsyncpa %s403, 1

</llo_original>
